<compile_context>
chip_gen: v6e
topology: v6e:2x2x1
jax: 0.10.0
libtpu: 0.0.40
codegen_flags: <defaults>
</compile_context>

<pallas_src>
import numpy as np
import jax
import jax.numpy as jnp
from jax.experimental import pallas as pl
from jax.experimental.pallas import tpu as pltpu

PI = np.pi


# ---------------------------------------------------------------------------
# Pallas kernel: out = diag(d) * x, split into real/imag planes.
#   (dr + i di) * (xr + i xi) = (dr xr - di xi) + i (dr xi + di xr)
# x tiles are (tb, td) with td on the 128-lane axis; the diagonal tile is
# (1, td) and broadcasts across the sublane (batch) axis.  Pure VPU work,
# HBM-bandwidth bound.
# ---------------------------------------------------------------------------
def crz_apply_kernel(dr_ref, di_ref, xr_ref, xi_ref, or_ref, oi_ref):
    dr = dr_ref[...]          # (1, td) -> broadcasts over rows
    di = di_ref[...]
    xr = xr_ref[...]          # (tb, td)
    xi = xi_ref[...]
    or_ref[...] = dr * xr - di * xi
    oi_ref[...] = dr * xi + di * xr


def _round_down(x, m):
    return (x // m) * m


def _choose_tiles(B, D, budget_bytes=2 * 1024 * 1024):
    """Pick (tb, td): sublane/lane tile sizes from a per-plane byte budget.

    Constraints: tb multiple of 8 or == B; td multiple of 128 or == D.
    td is capped so the D axis gets >= 2 grid steps when D allows (v7x megacore)
    and so the double-buffered working set stays well under v7x's 64 MiB VMEM.
    """
    # Sublane (batch) tile.
    tb = B if B <= 256 else 256          # 256 % 8 == 0; cdiv grid handles the rest
    # Lane (Hilbert-dim) tile.
    if D < 128:
        return tb, D                      # full-dim block (tiny problem)
    td = budget_bytes // (4 * max(tb, 1))
    td = max(128, _round_down(td, 128))
    td = min(td, max(128, _round_down(D, 128)))          # never exceed (rounded) D
    if D >= 2 * 128:                                      # >= 2 steps along D
        td = min(td, max(128, _round_down((D + 1) // 2, 128)))
    return tb, td


def crz_apply_planes(dr, di, xr, xi):
    """Apply diag(dr + i*di) to state planes xr/xi in lane-dense (B, D) layout.

    dr, di: (1, D) or (D,) float32; xr, xi: (B, D) float32.
    Returns (out_r, out_i), both (B, D) float32.  This is the zero-layout-cost
    path: chain gates by keeping the state as these planes.
    """
    B, D = xr.shape
    dr = dr.reshape(1, D).astype(jnp.float32)
    di = di.reshape(1, D).astype(jnp.float32)

    # Sub-tile-scale problems: pallas_call launch/step overhead exceeds the work.
    if D < 128 or B * D < 4096:
        return dr * xr - di * xi, dr * xi + di * xr

    tb, td = _choose_tiles(B, D)
    grid = (pl.cdiv(B, tb), pl.cdiv(D, td))

    return pl.pallas_call(
        crz_apply_kernel,
        out_shape=(jax.ShapeDtypeStruct((B, D), jnp.float32),
                   jax.ShapeDtypeStruct((B, D), jnp.float32)),
        grid=grid,
        in_specs=[
            pl.BlockSpec((1, td), lambda i, j: (0, j)),   # diag real
            pl.BlockSpec((1, td), lambda i, j: (0, j)),   # diag imag
            pl.BlockSpec((tb, td), lambda i, j: (i, j)),  # x real
            pl.BlockSpec((tb, td), lambda i, j: (i, j)),  # x imag
        ],
        out_specs=(
            pl.BlockSpec((tb, td), lambda i, j: (i, j)),
            pl.BlockSpec((tb, td), lambda i, j: (i, j)),
        ),
        compiler_params=pltpu.CompilerParams(
            dimension_semantics=("parallel", "parallel"),
            vmem_limit_bytes=40 * 1024 * 1024,
        ),
    )(dr, di, xr, xi)


# ---------------------------------------------------------------------------
# Diagonal construction: broadcast a (dim, dim) phase table over the index
# space viewed as (pre, dim@wire_lo, mid, dim@wire_hi, post).  Mirrors the
# quforge CRZ.forward index/value logic exactly (including `loc = local[c]`,
# which addresses the digit array that EXCLUDES the target wire).
# ---------------------------------------------------------------------------
def build_crz_diagonal_planes(angle, dim, wires, index, j):
    """Return (dr, di) float32 planes of shape (1, D) for the CRZ diagonal."""
    c, t = index[0], index[1]
    D = dim ** wires

    # `local[c]` in the reference indexes the digits of all wires except the
    # target, so in the full register it is wire c (c < t) or wire c+1 (c >= t);
    # for wires == 2 the reference hardcodes local[0] == the only non-target wire.
    if wires == 2:
        c_eff = 1 - t
    else:
        c_eff = c if c < t else c + 1

    theta = jnp.asarray(angle, dtype=jnp.float32).reshape(())
    a = jnp.arange(dim, dtype=jnp.float32)
    base = a * theta * 0.5 * np.sqrt(2.0 / (j * (j + 1)))     # per control digit

    kk = np.arange(dim)
    lt = jnp.asarray(kk < j, dtype=jnp.float32)               # exp(-i*base)
    eq = jnp.asarray(kk == j, dtype=jnp.float32)              # exp(+i*j*base)
    gt = jnp.asarray(kk > j, dtype=jnp.float32)                # 1

    # table[control_digit, target_digit]
    tab_r = (jnp.cos(base)[:, None] * lt[None, :]
             + jnp.cos(j * base)[:, None] * eq[None, :]
             + jnp.ones((dim, 1), jnp.float32) * gt[None, :])
    tab_i = (-jnp.sin(base)[:, None] * lt[None, :]
             + jnp.sin(j * base)[:, None] * eq[None, :])

    lo, hi = (c_eff, t) if c_eff < t else (t, c_eff)
    if c_eff > t:            # rank-5 axes are ordered (wire lo, wire hi)
        tab_r, tab_i = tab_r.T, tab_i.T
    n_pre = dim ** lo
    n_mid = dim ** (hi - lo - 1)
    n_post = dim ** (wires - 1 - hi)
    shape5 = (n_pre, dim, n_mid, dim, n_post)
    dr = jnp.broadcast_to(tab_r.reshape(1, dim, 1, dim, 1), shape5).reshape(1, D)
    di = jnp.broadcast_to(tab_i.reshape(1, dim, 1, dim, 1), shape5).reshape(1, D)
    return dr, di


# ---------------------------------------------------------------------------
# NumPy transliteration of the torch CRZ.forward loop (reference only).
# ---------------------------------------------------------------------------
def _dec2den(m, N, d):
    den = [0] * N
    jv = m
    for k in range(N):
        p = d ** (N - 1 - k)
        if jv >= p:
            den[k] = jv // p
            jv -= den[k] * p
    return den


def _den2dec(local, d):
    N = len(local)
    return sum(local[k] * d ** (N - 1 - k) for k in range(N))


def build_crz_diagonal_reference(angle, dim, wires, index, j):
    c, t = index[0], index[1]
    D = dim ** wires
    Dl = D // dim
    theta = float(np.asarray(angle).reshape(()))
    diag = np.zeros(D, dtype=np.complex64)
    for m in range(Dl):
        local = _dec2den(m, wires - 1, dim)
        loc = local[0] if wires == 2 else local[c]
        ang = loc * theta / 2.0 * np.sqrt(2.0 / (j * (j + 1)))
        for k in range(dim):
            listk = local.copy()
            listk.insert(t, k)
            intk = _den2dec(listk, dim)
            if k < j:
                diag[intk] = np.cos(ang) - 1j * np.sin(ang)
            elif k == j:
                ang = j * ang            # same mutation as the torch code
                diag[intk] = np.cos(ang) + 1j * np.sin(ang)
            else:
                diag[intk] = 1.0
    return diag


# ---------------------------------------------------------------------------
# Module wrapper
# ---------------------------------------------------------------------------
class CRZPallas:
    """JAX/Pallas equivalent of quforge CRZ (dense path, sparse=False)."""
    # TODO(synk): sparse=True (torch.sparse_coo_tensor) output path not
    # implemented; the diagonal-apply kernel never builds the dense D x D
    # matrix anyway.

    def __init__(self, index=(0, 1), dim=2, wires=2, j=1, key=None):
        self.index = tuple(index)
        self.dim = dim
        self.wires = wires
        self.j = j
        if key is None:
            key = jax.random.PRNGKey(0)
        # nn.Parameter(pi * torch.randn(1)) analogue, deterministic.
        self.angle = PI * jax.random.normal(key, (1,), dtype=jnp.float32)

    def diagonal_planes(self):
        return build_crz_diagonal_planes(self.angle, self.dim, self.wires,
                                         self.index, self.j)

    def apply_planes(self, xr, xi):
        """Fast path: state as (B, D) float32 planes; no layout HBM traffic."""
        dr, di = self.diagonal_planes()
        return crz_apply_planes(dr, di, xr, xi)

    def __call__(self, x):
        """Torch-style contract: complex x of shape (D,) or (D, B) -> same shape.

        Conversion to lane-dense planes happens only here (circuit boundary);
        chained gates should use apply_planes to avoid these round trips.
        """
        D = self.dim ** self.wires
        assert x.shape[0] == D, "state dimension must equal dim ** wires"
        squeeze = (x.ndim == 1)
        if squeeze:
            x = x[:, None]
        xr = jnp.real(x).astype(jnp.float32).T          # (B, D) lane-dense
        xi = jnp.imag(x).astype(jnp.float32).T
        out_r, out_i = self.apply_planes(xr, xi)
        out = (out_r + 1j * out_i).astype(jnp.complex64).T
        if squeeze:
            out = out[:, 0]
        return out


if __name__ == "__main__":
    key = jax.random.PRNGKey(0)
    k_a1, k_xr, k_xi, k_a2, k_x2 = jax.random.split(key, 5)

    # --- Case 1: dim=2, wires=10 -> D=1024 (two 512-wide D tiles), B=8 ---------
    dim, wires, B = 2, 10, 8
    D = dim ** wires
    gate = CRZPallas(index=(0, 1), dim=dim, wires=wires, j=1, key=k_a1)

    xr = jax.random.normal(k_xr, (D, B), dtype=jnp.float32)
    xi = jax.random.normal(k_xi, (D, B), dtype=jnp.float32)
    x = (xr + 1j * xi).astype(jnp.complex64)

    out = jax.block_until_ready(gate(x))

    diag_ref = build_crz_diagonal_reference(gate.angle, dim, wires,
                                            gate.index, gate.j)
    ref = diag_ref[:, None] * np.asarray(x)
    np.testing.assert_allclose(np.asarray(out), ref, rtol=1e-5, atol=1e-5)

    # Diagonal construction matches the reference loop exactly.
    dr, di = gate.diagonal_planes()
    np.testing.assert_allclose(np.asarray(dr[0] + 1j * di[0]), diag_ref,
                               rtol=1e-5, atol=1e-6)

    # Chained-gates path: state stays as (B, D) planes, no per-gate transposes.
    pr, pi_ = xr.T, xi.T
    pr, pi_ = gate.apply_planes(*gate.apply_planes(pr, pi_))
    chained = np.asarray(pr + 1j * pi_).T
    ref2x = (diag_ref ** 2)[:, None] * np.asarray(x)
    np.testing.assert_allclose(chained, ref2x, rtol=1e-4, atol=1e-4)

    # --- Case 2: dim=3, wires=6 -> D=729 (non-128-divisible, partial boundary
    #     block), control index > target index, j=2 -----------------------------
    dim2, wires2, B2 = 3, 6, 8
    D2 = dim2 ** wires2
    gate2 = CRZPallas(index=(2, 1), dim=dim2, wires=wires2, j=2, key=k_a2)
    x2 = jax.random.normal(k_x2, (D2, B2, 2), dtype=jnp.float32)
    x2c = (x2[..., 0] + 1j * x2[..., 1]).astype(jnp.complex64)
    out2 = jax.block_until_ready(gate2(x2c))
    diag_ref2 = build_crz_diagonal_reference(gate2.angle, dim2, wires2,
                                             gate2.index, gate2.j)
    ref2 = diag_ref2[:, None] * np.asarray(x2c)
    np.testing.assert_allclose(np.asarray(out2), ref2, rtol=1e-5, atol=1e-5)

    print("KERNEL_OK")
</pallas_src>

<mosaic_0001>
module attributes {stable_mosaic.version = 11 : i64} {
  func.func @crz_apply_kernel(%arg0: i32, %arg1: i32, %arg2: memref<1x512xf32, #tpu.memory_space<vmem>>, %arg3: memref<1x512xf32, #tpu.memory_space<vmem>>, %arg4: memref<8x512xf32, #tpu.memory_space<vmem>>, %arg5: memref<8x512xf32, #tpu.memory_space<vmem>>, %arg6: memref<8x512xf32, #tpu.memory_space<vmem>>, %arg7: memref<8x512xf32, #tpu.memory_space<vmem>>) attributes {dimension_semantics = [#tpu.dimension_semantics<parallel>, #tpu.dimension_semantics<parallel>], iteration_bounds = array<i64: 1, 2>, scalar_prefetch = 0 : i64, scratch_operands = 0 : i64, tpu.core_type = #tpu.core_type<tc>, window_params = [{transform_indices = @transform_0, window_bounds = array<i64: 1, 512>}, {transform_indices = @transform_1, window_bounds = array<i64: 1, 512>}, {transform_indices = @transform_2, window_bounds = array<i64: 8, 512>}, {transform_indices = @transform_3, window_bounds = array<i64: 8, 512>}, {transform_indices = @transform_4, window_bounds = array<i64: 8, 512>}, {transform_indices = @transform_5, window_bounds = array<i64: 8, 512>}]} {
    %c0 = arith.constant 0 : index
    %c0_0 = arith.constant 0 : index
    %0 = vector.load %arg2[%c0, %c0_0] : memref<1x512xf32, #tpu.memory_space<vmem>>, vector<1x512xf32>
    %c0_1 = arith.constant 0 : index
    %c0_2 = arith.constant 0 : index
    %1 = vector.load %arg3[%c0_1, %c0_2] : memref<1x512xf32, #tpu.memory_space<vmem>>, vector<1x512xf32>
    %c0_3 = arith.constant 0 : index
    %c0_4 = arith.constant 0 : index
    %2 = vector.load %arg4[%c0_3, %c0_4] : memref<8x512xf32, #tpu.memory_space<vmem>>, vector<8x512xf32>
    %c0_5 = arith.constant 0 : index
    %c0_6 = arith.constant 0 : index
    %3 = vector.load %arg5[%c0_5, %c0_6] : memref<8x512xf32, #tpu.memory_space<vmem>>, vector<8x512xf32>
    %4 = vector.broadcast %0 : vector<1x512xf32> to vector<8x512xf32>
    %5 = arith.mulf %4, %2 : vector<8x512xf32>
    %6 = vector.broadcast %1 : vector<1x512xf32> to vector<8x512xf32>
    %7 = arith.mulf %6, %3 : vector<8x512xf32>
    %8 = arith.subf %5, %7 : vector<8x512xf32>
    %c0_7 = arith.constant 0 : index
    %c0_8 = arith.constant 0 : index
    %9 = vector.load %arg6[%c0_7, %c0_8] : memref<8x512xf32, #tpu.memory_space<vmem>>, vector<8x512xf32>
    tpu.vector_store %arg6[%c0_7, %c0_8], %8 {strides = array<i32>} : memref<8x512xf32, #tpu.memory_space<vmem>>, vector<8x512xf32>,
    %10 = vector.broadcast %0 : vector<1x512xf32> to vector<8x512xf32>
    %11 = arith.mulf %10, %3 : vector<8x512xf32>
    %12 = vector.broadcast %1 : vector<1x512xf32> to vector<8x512xf32>
    %13 = arith.mulf %12, %2 : vector<8x512xf32>
    %14 = arith.addf %11, %13 : vector<8x512xf32>
    %c0_9 = arith.constant 0 : index
    %c0_10 = arith.constant 0 : index
    %15 = vector.load %arg7[%c0_9, %c0_10] : memref<8x512xf32, #tpu.memory_space<vmem>>, vector<8x512xf32>
    tpu.vector_store %arg7[%c0_9, %c0_10], %14 {strides = array<i32>} : memref<8x512xf32, #tpu.memory_space<vmem>>, vector<8x512xf32>,
    return
  }
  func.func @transform_0(%arg0: i32, %arg1: i32) -> (i32, i32) {
    %c0_i32 = arith.constant 0 : i32
    %c0_i32_0 = arith.constant 0 : i32
    return %c0_i32, %arg1 : i32, i32
  }
  func.func @transform_1(%arg0: i32, %arg1: i32) -> (i32, i32) {
    %c0_i32 = arith.constant 0 : i32
    %c0_i32_0 = arith.constant 0 : i32
    return %c0_i32, %arg1 : i32, i32
  }
  func.func @transform_2(%arg0: i32, %arg1: i32) -> (i32, i32) {
    %c0_i32 = arith.constant 0 : i32
    return %arg0, %arg1 : i32, i32
  }
  func.func @transform_3(%arg0: i32, %arg1: i32) -> (i32, i32) {
    %c0_i32 = arith.constant 0 : i32
    return %arg0, %arg1 : i32, i32
  }
  func.func @transform_4(%arg0: i32, %arg1: i32) -> (i32, i32) {
    %c0_i32 = arith.constant 0 : i32
    return %arg0, %arg1 : i32, i32
  }
  func.func @transform_5(%arg0: i32, %arg1: i32) -> (i32, i32) {
    %c0_i32 = arith.constant 0 : i32
    return %arg0, %arg1 : i32, i32
  }
}

</mosaic_0001>

<llo_original>
// kernel: tpu_custom_call.1
$region0: #{tpu_custom_call.1}
  #allocation0 [shape = 'u32[]', space=smem, size = 0x4, offset = 0x4, fixed_abs, tag = 'smem constant byte address 0x4 - core index']
  #allocation1 [shape = 'u32[144,128]{1,0:T(1,128)}', space=vmem, size = 0x12000, scoped, tag = 'internal scratch']
  %s0 = inlined_call_operand.hbm [shape: f32[1,1024], index: 0, kind: input, shape index: {}]
  %s1 = inlined_call_operand.hbm [shape: f32[1,1024], index: 1, kind: input, shape index: {}]
  %s2 = inlined_call_operand.hbm [shape: f32[8,1024], index: 2, kind: input, shape index: {}]
  %s3 = inlined_call_operand.hbm [shape: f32[8,1024], index: 3, kind: input, shape index: {}]
  %s4 = inlined_call_operand.hbm [shape: f32[8,1024], index: 4, kind: output, shape index: {0}]
  %s5 = inlined_call_operand.hbm [shape: f32[8,1024], index: 5, kind: output, shape index: {1}]
  %6 = xla_tuple %s4, %s5
  %s7 = sld [smem:[#allocation0]]
  $region73: #{tpu_custom_call.1} parent=0
    _
  %s9 = ssub.s32 1, %s7
  %s10 = scalar_select 0, %s9, %s7
  $region1: #{tpu_custom_call.1} parent=0
    #allocation2 [shape = 'u8[4096]{0}', space=vmem, size = 0x1000, scoped, tag = 'input window, operand 0']
    #allocation3 [shape = 's32[2]{0}', space=sflag, size = 0x8, scoped, tag = 'scoped memory for tpu_custom_call.1']
    #allocation4 [shape = 's32[2]{0}', space=sflag, size = 0x8, scoped, tag = 'scoped memory for tpu_custom_call.1']
    #allocation5 [shape = 'u8[4096]{0}', space=vmem, size = 0x1000, scoped, tag = 'input window, operand 1']
    #allocation6 [shape = 's32[2]{0}', space=sflag, size = 0x8, scoped, tag = 'scoped memory for tpu_custom_call.1']
    #allocation7 [shape = 'u8[32768]{0}', space=vmem, size = 0x8000, scoped, tag = 'input window, operand 2']
    #allocation8 [shape = 'u8[32768]{0}', space=vmem, size = 0x8000, scoped, tag = 'input window, operand 3']
    #allocation9 [shape = 's32[2]{0}', space=sflag, size = 0x8, scoped, tag = 'scoped memory for tpu_custom_call.1']
    #allocation10 [shape = 'u8[32768]{0}', space=vmem, size = 0x8000, scoped, tag = 'output window, operand 0']
    #allocation11 [shape = 'u8[32768]{0}', space=vmem, size = 0x8000, scoped, tag = 'output window, operand 1']
    #allocation12 [shape = 's32[2]{0}', space=sflag, size = 0x8, scoped, tag = 'scoped memory for tpu_custom_call.1']
    %11 = vsyncpa [#allocation3], 0
    %s12 = scalar_lea.sflag [#allocation3], 1
    %13 = vsyncpa %s12, 0
    %14 = vsyncpa [#allocation6], 0
    %s15 = scalar_lea.sflag [#allocation6], 1
    %16 = vsyncpa %s15, 0
    %17 = vsyncpa [#allocation9], 0
    %s18 = scalar_lea.sflag [#allocation9], 1
    %19 = vsyncpa %s18, 0
    %20 = vsyncpa [#allocation4], 0
    %s21 = scalar_lea.sflag [#allocation4], 1
    %22 = vsyncpa %s21, 0
    %23 = vsyncpa [#allocation12], 0
    %s24 = scalar_lea.sflag [#allocation12], 1
    %25 = vsyncpa %s24, 0
    loop: start=0, step=1, limit=4
    $region2: #{tpu_custom_call.1} parent=1 // loop_pre_header
      _
    $region3: #{tpu_custom_call.1} parent=1 // loop_header
      %s27 = sphi 0, %s31
      %p28 = scmp.ge.s32.totalorder %s27, 4
      %s34 = sphi 0, %s46
      %s35 = sphi 0, %s42
      %s36 = sphi 0, %s34
      %s37 = sphi 0, %s35
      %s38 = sphi 0, %s36
      %s39 = sphi 0, %s37
      %s49 = sphi 0, %s51
      %s52 = sphi 0, %s49
      %s53 = sphi 0, %s52
      %s69 = sphi 0, %s53
      %s75 = sphi 0, %s77
      %s78 = sphi 0, %s75
      %s79 = sphi 0, %s78
      %s95 = sphi 0, %s79
      %s103 = sphi 0, %s105
      %s106 = sphi 0, %s103
      %s107 = sphi 0, %s106
      %s123 = sphi 0, %s107
      %s131 = sphi 0, %s133
      %s134 = sphi 0, %s131
      %s135 = sphi 0, %s134
      %s151 = sphi 0, %s135
      %s159 = sphi 0, %s161
      %s162 = sphi 0, %s159
      %s163 = sphi 0, %s162
      %s179 = sphi 0, %s163
      %s187 = sphi 0, %s189
      %s190 = sphi 0, %s187
      %s191 = sphi 0, %s190
      %s207 = sphi 0, %s191
    $region4: #{tpu_custom_call.1} parent=1 // loop_header_branch
      %30 = sbr.rel (%p28) target = $region8
    $region5: #{tpu_custom_call.1} parent=1 // loop_body
      %s32 = ssub.s32 %s27, 1
      %s33 = ssub.s32 %s27, 2
      %s40 = sadd.s32 1, %s35
      %p41 = scmp.ge.s32.totalorder %s40, 2
      %s42 = scalar_select %p41, 0, %s40
      %s43 = sadd.s32 1, %s34
      %s44 = scalar_select %p41, %s43, %s34
      %p45 = scmp.ge.s32.totalorder %s44, 1
      %s46 = scalar_select %p45, 0, %s44
      %s47 = ssub.s32 %s35, %s42
      %p48 = scmp.eq.s32.totalorder %s47, 0
      %s50 = sadd.s32 %s49, 1
      %s51 = scalar_select %p48, %s49, %s50
      %p54 = pneg %p48
      %p55 = scmp.eq.s32.totalorder %s27, 1
      %p56 = por %p54, %p55
      %p57 = scmp.ne.s32.totalorder %s49, %s52
      %p58 = scmp.eq.s32.totalorder %s27, 0
      %p59 = por %p57, %p58
      %p60 = scmp.ne.s32.totalorder %s49, %s52
      %p61 = scmp.eq.s32.totalorder %s32, 1
      %p62 = por %p60, %p61
      %p63 = scmp.ne.s32.totalorder %s52, %s53
      %p64 = scmp.eq.s32.totalorder %s32, 0
      %p65 = por %p63, %p64
      %p66 = scmp.ne.s32.totalorder %s52, %s53
      %p67 = scmp.eq.s32.totalorder %s33, 1
      %p68 = por %p66, %p67
      %p70 = scmp.ne.s32.totalorder %s53, %s69
      %p71 = scmp.eq.s32.totalorder %s33, 0
      %p72 = por %p70, %p71
      %s73 = ssub.s32 %s35, %s42
      %p74 = scmp.eq.s32.totalorder %s73, 0
      %s76 = sadd.s32 %s75, 1
      %s77 = scalar_select %p74, %s75, %s76
      %p80 = pneg %p74
      %p81 = scmp.eq.s32.totalorder %s27, 1
      %p82 = por %p80, %p81
      %p83 = scmp.ne.s32.totalorder %s75, %s78
      %p84 = scmp.eq.s32.totalorder %s27, 0
      %p85 = por %p83, %p84
      %p86 = scmp.ne.s32.totalorder %s75, %s78
      %p87 = scmp.eq.s32.totalorder %s32, 1
      %p88 = por %p86, %p87
      %p89 = scmp.ne.s32.totalorder %s78, %s79
      %p90 = scmp.eq.s32.totalorder %s32, 0
      %p91 = por %p89, %p90
      %p92 = scmp.ne.s32.totalorder %s78, %s79
      %p93 = scmp.eq.s32.totalorder %s33, 1
      %p94 = por %p92, %p93
      %p96 = scmp.ne.s32.totalorder %s79, %s95
      %p97 = scmp.eq.s32.totalorder %s33, 0
      %p98 = por %p96, %p97
      %s99 = ssub.s32 %s34, %s46
      %s100 = ssub.s32 %s35, %s42
      %s101 = sor.u32 %s99, %s100
      %p102 = scmp.eq.s32.totalorder %s101, 0
      %s104 = sadd.s32 %s103, 1
      %s105 = scalar_select %p102, %s103, %s104
      %p108 = pneg %p102
      %p109 = scmp.eq.s32.totalorder %s27, 1
      %p110 = por %p108, %p109
      %p111 = scmp.ne.s32.totalorder %s103, %s106
      %p112 = scmp.eq.s32.totalorder %s27, 0
      %p113 = por %p111, %p112
      %p114 = scmp.ne.s32.totalorder %s103, %s106
      %p115 = scmp.eq.s32.totalorder %s32, 1
      %p116 = por %p114, %p115
      %p117 = scmp.ne.s32.totalorder %s106, %s107
      %p118 = scmp.eq.s32.totalorder %s32, 0
      %p119 = por %p117, %p118
      %p120 = scmp.ne.s32.totalorder %s106, %s107
      %p121 = scmp.eq.s32.totalorder %s33, 1
      %p122 = por %p120, %p121
      %p124 = scmp.ne.s32.totalorder %s107, %s123
      %p125 = scmp.eq.s32.totalorder %s33, 0
      %p126 = por %p124, %p125
      %s127 = ssub.s32 %s34, %s46
      %s128 = ssub.s32 %s35, %s42
      %s129 = sor.u32 %s127, %s128
      %p130 = scmp.eq.s32.totalorder %s129, 0
      %s132 = sadd.s32 %s131, 1
      %s133 = scalar_select %p130, %s131, %s132
      %p136 = pneg %p130
      %p137 = scmp.eq.s32.totalorder %s27, 1
      %p138 = por %p136, %p137
      %p139 = scmp.ne.s32.totalorder %s131, %s134
      %p140 = scmp.eq.s32.totalorder %s27, 0
      %p141 = por %p139, %p140
      %p142 = scmp.ne.s32.totalorder %s131, %s134
      %p143 = scmp.eq.s32.totalorder %s32, 1
      %p144 = por %p142, %p143
      %p145 = scmp.ne.s32.totalorder %s134, %s135
      %p146 = scmp.eq.s32.totalorder %s32, 0
      %p147 = por %p145, %p146
      %p148 = scmp.ne.s32.totalorder %s134, %s135
      %p149 = scmp.eq.s32.totalorder %s33, 1
      %p150 = por %p148, %p149
      %p152 = scmp.ne.s32.totalorder %s135, %s151
      %p153 = scmp.eq.s32.totalorder %s33, 0
      %p154 = por %p152, %p153
      %s155 = ssub.s32 %s34, %s46
      %s156 = ssub.s32 %s35, %s42
      %s157 = sor.u32 %s155, %s156
      %p158 = scmp.eq.s32.totalorder %s157, 0
      %s160 = sadd.s32 %s159, 1
      %s161 = scalar_select %p158, %s159, %s160
      %p164 = pneg %p158
      %p165 = scmp.eq.s32.totalorder %s27, 1
      %p166 = por %p164, %p165
      %p167 = scmp.ne.s32.totalorder %s159, %s162
      %p168 = scmp.eq.s32.totalorder %s27, 0
      %p169 = por %p167, %p168
      %p170 = scmp.ne.s32.totalorder %s159, %s162
      %p171 = scmp.eq.s32.totalorder %s32, 1
      %p172 = por %p170, %p171
      %p173 = scmp.ne.s32.totalorder %s162, %s163
      %p174 = scmp.eq.s32.totalorder %s32, 0
      %p175 = por %p173, %p174
      %p176 = scmp.ne.s32.totalorder %s162, %s163
      %p177 = scmp.eq.s32.totalorder %s33, 1
      %p178 = por %p176, %p177
      %p180 = scmp.ne.s32.totalorder %s163, %s179
      %p181 = scmp.eq.s32.totalorder %s33, 0
      %p182 = por %p180, %p181
      %s183 = ssub.s32 %s34, %s46
      %s184 = ssub.s32 %s35, %s42
      %s185 = sor.u32 %s183, %s184
      %p186 = scmp.eq.s32.totalorder %s185, 0
      %s188 = sadd.s32 %s187, 1
      %s189 = scalar_select %p186, %s187, %s188
      %p192 = pneg %p186
      %p193 = scmp.eq.s32.totalorder %s27, 1
      %p194 = por %p192, %p193
      %p195 = scmp.ne.s32.totalorder %s187, %s190
      %p196 = scmp.eq.s32.totalorder %s27, 0
      %p197 = por %p195, %p196
      %p198 = scmp.ne.s32.totalorder %s187, %s190
      %p199 = scmp.eq.s32.totalorder %s32, 1
      %p200 = por %p198, %p199
      %p201 = scmp.ne.s32.totalorder %s190, %s191
      %p202 = scmp.eq.s32.totalorder %s32, 0
      %p203 = por %p201, %p202
      %p204 = scmp.ne.s32.totalorder %s190, %s191
      %p205 = scmp.eq.s32.totalorder %s33, 1
      %p206 = por %p204, %p205
      %p208 = scmp.ne.s32.totalorder %s191, %s207
      %p209 = scmp.eq.s32.totalorder %s33, 0
      %p210 = por %p208, %p209
      %p211 = scmp.le.s32.totalorder 1, %s27
      %p212 = scmp.lt.s32.totalorder %s27, 3
      %p213 = pnand %p211, %p212
      %p214 = pneg %p213
      // Predicated region
      $region9: #{tpu_custom_call.1} parent=5 // pred_check
        _
      $region10: #{tpu_custom_call.1} parent=5 // pred_check_branch
        %216 = sbr.rel (%p213) target = $region12
      $region11: #{tpu_custom_call.1} parent=5 // pred_region
        %s217 = ssub.s32 %s27, 1
      $region12: #{tpu_custom_call.1} parent=5 // pred_fallthru
        _
      %p218 = scmp.lt.s32.totalorder %s27, 2
      // Predicated region
      $region13: #{tpu_custom_call.1} parent=5 // pred_check
        %p219 = pneg %p218
      $region14: #{tpu_custom_call.1} parent=5 // pred_check_branch
        %221 = sbr.rel (%p219) target = $region16
      $region15: #{tpu_custom_call.1} parent=5 // pred_region
        // Predicated region
        $region17: #{tpu_custom_call.1} parent=15 // pred_check
          %p222 = pneg %p59
        $region18: #{tpu_custom_call.1} parent=15 // pred_check_branch
          %224 = sbr.rel (%p222) target = $region20
        $region19: #{tpu_custom_call.1} parent=15 // pred_region
          %s225 = sand.u32 %s49, 1
          %s226 = scalar_lea.sflag [#allocation3], %s225
          %s227 = sand.u32 %s49, 1
          %s228 = smul.addr %s227, 4
          %s229 = scalar_lea.vmem [#allocation2], %s228
          %s230 = smul.u32 4, %s35
          %s232 = ssub.s32 64, 64
          %233 = vsyncadd %s226, %s232
          %s234 = smul.addr %s230, 16
          %s235 = scalar_lea.hbm %s0, %s234
          %s237 = sshll.u32 %s229, 4
          %s238 = int_to_ptr.vmem [resolvable:$true] %s237
          %240 = dma.hbm_to_vmem [thread:$0]  %s235, 64, %s238, %s226
        $region20: #{tpu_custom_call.1} parent=15 // pred_fallthru
          _
        // Predicated region
        $region21: #{tpu_custom_call.1} parent=15 // pred_check
          %p241 = pneg %p85
        $region22: #{tpu_custom_call.1} parent=15 // pred_check_branch
          %243 = sbr.rel (%p241) target = $region24
        $region23: #{tpu_custom_call.1} parent=15 // pred_region
          %s244 = sand.u32 %s27, 1
          %s245 = scalar_lea.sflag [#allocation6], %s244
          %s246 = sand.u32 %s75, 1
          %s247 = smul.addr %s246, 4
          %s248 = scalar_lea.vmem [#allocation5], %s247
          %s249 = smul.u32 4, %s35
          %s251 = ssub.s32 64, 64
          %252 = vsyncadd %s245, %s251
          %s253 = smul.addr %s249, 16
          %s254 = scalar_lea.hbm %s1, %s253
          %s256 = sshll.u32 %s248, 4
          %s257 = int_to_ptr.vmem [resolvable:$true] %s256
          %259 = dma.hbm_to_vmem [thread:$0]  %s254, 64, %s257, %s245
        $region24: #{tpu_custom_call.1} parent=15 // pred_fallthru
          _
        // Predicated region
        $region25: #{tpu_custom_call.1} parent=15 // pred_check
          %p260 = pneg %p113
        $region26: #{tpu_custom_call.1} parent=15 // pred_check_branch
          %262 = sbr.rel (%p260) target = $region28
        $region27: #{tpu_custom_call.1} parent=15 // pred_region
          %s263 = sand.u32 %s27, 1
          %s264 = scalar_lea.sflag [#allocation6], %s263
          %s265 = sand.u32 %s103, 1
          %s266 = smul.addr %s265, 32
          %s267 = scalar_lea.vmem [#allocation7], %s266
          %s268 = smul.u32 4, %s35
          %s270 = ssub.s32 512, 512
          %271 = vsyncadd %s264, %s270
          %s272 = smul.addr %s34, 8
          %s273 = sadd.s32 %s268, %s272
          %s274 = smul.addr %s273, 128
          %s275 = scalar_lea.hbm %s2, %s274
          %s277 = sshll.u32 %s267, 4
          %s278 = int_to_ptr.vmem [resolvable:$true] %s277
          %280 = dma.hbm_to_vmem [thread:$0]  %s275, 512, %s278, %s264
        $region28: #{tpu_custom_call.1} parent=15 // pred_fallthru
          _
        // Predicated region
        $region29: #{tpu_custom_call.1} parent=15 // pred_check
          %p281 = pneg %p141
        $region30: #{tpu_custom_call.1} parent=15 // pred_check_branch
          %283 = sbr.rel (%p281) target = $region32
        $region31: #{tpu_custom_call.1} parent=15 // pred_region
          %s284 = sand.u32 %s131, 1
          %s285 = scalar_lea.sflag [#allocation9], %s284
          %s286 = sand.u32 %s131, 1
          %s287 = smul.addr %s286, 32
          %s288 = scalar_lea.vmem [#allocation8], %s287
          %s289 = smul.u32 4, %s35
          %s291 = ssub.s32 512, 512
          %292 = vsyncadd %s285, %s291
          %s293 = smul.addr %s34, 8
          %s294 = sadd.s32 %s289, %s293
          %s295 = smul.addr %s294, 128
          %s296 = scalar_lea.hbm %s3, %s295
          %s298 = sshll.u32 %s288, 4
          %s299 = int_to_ptr.vmem [resolvable:$true] %s298
          %301 = dma.hbm_to_vmem [thread:$0]  %s296, 512, %s299, %s285
        $region32: #{tpu_custom_call.1} parent=15 // pred_fallthru
          _
      $region16: #{tpu_custom_call.1} parent=5 // pred_fallthru
        _
      %p302 = scmp.le.s32.totalorder 1, %s27
      %p303 = scmp.lt.s32.totalorder %s27, 3
      %p304 = pnand %p302, %p303
      %p305 = pneg %p304
      // Predicated region
      $region33: #{tpu_custom_call.1} parent=5 // pred_check
        _
      $region34: #{tpu_custom_call.1} parent=5 // pred_check_branch
        %307 = sbr.rel (%p304) target = $region36
      $region35: #{tpu_custom_call.1} parent=5 // pred_region
        %s308 = ssub.s32 %s27, 1
        %s309 = sand.u32 %s52, 1
        %s310 = scalar_lea.sflag [#allocation3], %s309
        %s311 = sand.u32 %s52, 1
        %s312 = smul.addr %s311, 4
        %s313 = scalar_lea.vmem [#allocation2], %s312
        // Predicated region
        $region37: #{tpu_custom_call.1} parent=35 // pred_check
          %p314 = pneg %p65
        $region38: #{tpu_custom_call.1} parent=35 // pred_check_branch
          %316 = sbr.rel (%p314) target = $region40
        $region39: #{tpu_custom_call.1} parent=35 // pred_region
          %317 = dma.done %s310, 64
        $region40: #{tpu_custom_call.1} parent=35 // pred_fallthru
          _
        %s318 = sand.u32 %s32, 1
        %s319 = scalar_lea.sflag [#allocation6], %s318
        %s320 = sand.u32 %s78, 1
        %s321 = smul.addr %s320, 4
        %s322 = scalar_lea.vmem [#allocation5], %s321
        // Predicated region
        $region41: #{tpu_custom_call.1} parent=35 // pred_check
          %p323 = pneg %p91
        $region42: #{tpu_custom_call.1} parent=35 // pred_check_branch
          %325 = sbr.rel (%p323) target = $region44
        $region43: #{tpu_custom_call.1} parent=35 // pred_region
          %326 = dma.done %s319, 64
        $region44: #{tpu_custom_call.1} parent=35 // pred_fallthru
          _
        %s327 = sand.u32 %s32, 1
        %s328 = scalar_lea.sflag [#allocation6], %s327
        %s329 = sand.u32 %s106, 1
        %s330 = smul.addr %s329, 32
        %s331 = scalar_lea.vmem [#allocation7], %s330
        // Predicated region
        $region45: #{tpu_custom_call.1} parent=35 // pred_check
          %p332 = pneg %p119
        $region46: #{tpu_custom_call.1} parent=35 // pred_check_branch
          %334 = sbr.rel (%p332) target = $region48
        $region47: #{tpu_custom_call.1} parent=35 // pred_region
          %335 = dma.done %s328, 512
        $region48: #{tpu_custom_call.1} parent=35 // pred_fallthru
          _
        %s336 = sand.u32 %s134, 1
        %s337 = scalar_lea.sflag [#allocation9], %s336
        %s338 = sand.u32 %s134, 1
        %s339 = smul.addr %s338, 32
        %s340 = scalar_lea.vmem [#allocation8], %s339
        // Predicated region
        $region49: #{tpu_custom_call.1} parent=35 // pred_check
          %p341 = pneg %p147
        $region50: #{tpu_custom_call.1} parent=35 // pred_check_branch
          %343 = sbr.rel (%p341) target = $region52
        $region51: #{tpu_custom_call.1} parent=35 // pred_region
          %344 = dma.done %s337, 512
        $region52: #{tpu_custom_call.1} parent=35 // pred_fallthru
          _
        %s345 = sand.u32 %s52, 1
        %s346 = scalar_lea.sflag [#allocation3], %s345
        %s347 = sand.u32 %s52, 1
        %s348 = smul.addr %s347, 4
        %s349 = scalar_lea.vmem [#allocation2], %s348
        %p350 = pneg %p65
        %p351 = pneg %p62
        %s352 = sand.u32 %s32, 1
        %s353 = scalar_lea.sflag [#allocation6], %s352
        %s354 = sand.u32 %s78, 1
        %s355 = smul.addr %s354, 4
        %s356 = scalar_lea.vmem [#allocation5], %s355
        %p357 = pneg %p91
        %p358 = pneg %p88
        %s359 = sand.u32 %s32, 1
        %s360 = scalar_lea.sflag [#allocation6], %s359
        %s361 = sand.u32 %s106, 1
        %s362 = smul.addr %s361, 32
        %s363 = scalar_lea.vmem [#allocation7], %s362
        %p364 = pneg %p119
        %p365 = pneg %p116
        %s366 = sand.u32 %s134, 1
        %s367 = scalar_lea.sflag [#allocation9], %s366
        %s368 = sand.u32 %s134, 1
        %s369 = smul.addr %s368, 32
        %s370 = scalar_lea.vmem [#allocation8], %s369
        %p371 = pneg %p147
        %p372 = pneg %p144
        %p373 = pneg %p175
        %p374 = pneg %p172
        %s375 = sand.u32 %s162, 1
        %s376 = scalar_lea.sflag [#allocation4], %s375
        %s377 = sand.u32 %s162, 1
        %s378 = smul.addr %s377, 32
        %s379 = scalar_lea.vmem [#allocation10], %s378
        %p380 = pneg %p203
        %p381 = pneg %p200
        %s382 = sand.u32 %s190, 1
        %s383 = scalar_lea.sflag [#allocation12], %s382
        %s384 = sand.u32 %s190, 1
        %s385 = smul.addr %s384, 32
        %s386 = scalar_lea.vmem [#allocation11], %s385
        %s387 = smul.u32 4, %s37
        %s388 = smul.u32 4, %s37
        %s389 = smul.u32 4, %s37
        %s390 = smul.u32 4, %s37
        %s391 = smul.u32 4, %s37
        %s392 = smul.u32 4, %s37
        %v393 = vld [vmem:[%s313] sm:$0xf]
        %v394 = vld [vmem:[%s322] sm:$0xf]
        %v395 = vld [vmem:[%s331] sm:$0xff]
        %v396 = vld [vmem:[%s331 + $0x8] sm:$0xff]
        %v397 = vld [vmem:[%s331 + $0x10] sm:$0xff]
        %v398 = vld [vmem:[%s331 + $0x18] sm:$0xff]
        %v399 = vld [vmem:[%s340] sm:$0xff]
        %v400 = vld [vmem:[%s340 + $0x8] sm:$0xff]
        %v401 = vld [vmem:[%s340 + $0x10] sm:$0xff]
        %v402 = vld [vmem:[%s340 + $0x18] sm:$0xff]
        %v404 = vlaneseq
        %v405 = vshrl.u32 %v404, 7
        %v406 = vsub.s32 0, %v405
        %v407 = vrot.slane %v393, %v406
        %v408 = vlaneseq
        %v409 = vshrl.u32 %v408, 7
        %v410 = vsub.s32 1, %v409
        %v411 = vrot.slane %v393, %v410
        %v412 = vlaneseq
        %v413 = vshrl.u32 %v412, 7
        %v414 = vsub.s32 2, %v413
        %v415 = vrot.slane %v393, %v414
        %v416 = vlaneseq
        %v417 = vshrl.u32 %v416, 7
        %v418 = vsub.s32 3, %v417
        %v419 = vrot.slane %v393, %v418
        %v424 = vmul.f32 %v407, %v395
        %v425 = vmul.f32 %v411, %v396
        %v426 = vmul.f32 %v415, %v397
        %v427 = vmul.f32 %v419, %v398
        %v429 = vlaneseq
        %v430 = vshrl.u32 %v429, 7
        %v431 = vsub.s32 0, %v430
        %v432 = vrot.slane %v394, %v431
        %v433 = vlaneseq
        %v434 = vshrl.u32 %v433, 7
        %v435 = vsub.s32 1, %v434
        %v436 = vrot.slane %v394, %v435
        %v437 = vlaneseq
        %v438 = vshrl.u32 %v437, 7
        %v439 = vsub.s32 2, %v438
        %v440 = vrot.slane %v394, %v439
        %v441 = vlaneseq
        %v442 = vshrl.u32 %v441, 7
        %v443 = vsub.s32 3, %v442
        %v444 = vrot.slane %v394, %v443
        %v449 = vmul.f32 %v432, %v399
        %v450 = vmul.f32 %v436, %v400
        %v451 = vmul.f32 %v440, %v401
        %v452 = vmul.f32 %v444, %v402
        %v453 = vsub.f32 %v424, %v449
        %v454 = vsub.f32 %v425, %v450
        %v455 = vsub.f32 %v426, %v451
        %v456 = vsub.f32 %v427, %v452
        %457 = vst [vmem:[%s379] sm:$0xff] %v453
        %458 = vst [vmem:[%s379 + $0x8] sm:$0xff] %v454
        %459 = vst [vmem:[%s379 + $0x10] sm:$0xff] %v455
        %460 = vst [vmem:[%s379 + $0x18] sm:$0xff] %v456
        %v461 = vmul.f32 %v407, %v399
        %v462 = vmul.f32 %v411, %v400
        %v463 = vmul.f32 %v415, %v401
        %v464 = vmul.f32 %v419, %v402
        %v465 = vmul.f32 %v432, %v395
        %v466 = vmul.f32 %v436, %v396
        %v467 = vmul.f32 %v440, %v397
        %v468 = vmul.f32 %v444, %v398
        %v469 = vadd.f32 %v461, %v465
        %v470 = vadd.f32 %v462, %v466
        %v471 = vadd.f32 %v463, %v467
        %v472 = vadd.f32 %v464, %v468
        %473 = vst [vmem:[%s386] sm:$0xff] %v469
        %474 = vst [vmem:[%s386 + $0x8] sm:$0xff] %v470
        %475 = vst [vmem:[%s386 + $0x10] sm:$0xff] %v471
        %476 = vst [vmem:[%s386 + $0x18] sm:$0xff] %v472
        %s477 = sand.u32 %s162, 1
        %s478 = scalar_lea.sflag [#allocation4], %s477
        %s479 = sand.u32 %s162, 1
        %s480 = smul.addr %s479, 32
        %s481 = scalar_lea.vmem [#allocation10], %s480
        %s482 = sand.u32 %s190, 1
        %s483 = scalar_lea.sflag [#allocation12], %s482
        %s484 = sand.u32 %s190, 1
        %s485 = smul.addr %s484, 32
        %s486 = scalar_lea.vmem [#allocation11], %s485
        // Predicated region
        $region53: #{tpu_custom_call.1} parent=35 // pred_check
          %p487 = pneg %p172
        $region54: #{tpu_custom_call.1} parent=35 // pred_check_branch
          %489 = sbr.rel (%p487) target = $region56
        $region55: #{tpu_custom_call.1} parent=35 // pred_region
          %s490 = smul.u32 4, %s37
          %s492 = ssub.s32 512, 512
          %493 = vsyncadd %s478, %s492
          %s494 = smul.addr %s36, 8
          %s495 = sadd.s32 %s490, %s494
          %s496 = smul.addr %s495, 128
          %s497 = scalar_lea.hbm %s4, %s496
          %s499 = sshll.u32 %s481, 4
          %s500 = int_to_ptr.vmem [resolvable:$true] %s499
          %502 = dma.vmem_to_hbm [thread:$0]  %s500, 512, %s497, %s478
        $region56: #{tpu_custom_call.1} parent=35 // pred_fallthru
          _
        // Predicated region
        $region57: #{tpu_custom_call.1} parent=35 // pred_check
          %p503 = pneg %p200
        $region58: #{tpu_custom_call.1} parent=35 // pred_check_branch
          %505 = sbr.rel (%p503) target = $region60
        $region59: #{tpu_custom_call.1} parent=35 // pred_region
          %s506 = smul.u32 4, %s37
          %s508 = ssub.s32 512, 512
          %509 = vsyncadd %s483, %s508
          %s510 = smul.addr %s36, 8
          %s511 = sadd.s32 %s506, %s510
          %s512 = smul.addr %s511, 128
          %s513 = scalar_lea.hbm %s5, %s512
          %s515 = sshll.u32 %s486, 4
          %s516 = int_to_ptr.vmem [resolvable:$true] %s515
          %518 = dma.vmem_to_hbm [thread:$0]  %s516, 512, %s513, %s483
        $region60: #{tpu_custom_call.1} parent=35 // pred_fallthru
          _
      $region36: #{tpu_custom_call.1} parent=5 // pred_fallthru
        _
      %p519 = scmp.le.s32.totalorder 2, %s27
      // Predicated region
      $region61: #{tpu_custom_call.1} parent=5 // pred_check
        %p520 = pneg %p519
      $region62: #{tpu_custom_call.1} parent=5 // pred_check_branch
        %522 = sbr.rel (%p520) target = $region64
      $region63: #{tpu_custom_call.1} parent=5 // pred_region
        %s523 = ssub.s32 %s27, 2
        // Predicated region
        $region65: #{tpu_custom_call.1} parent=63 // pred_check
          %p524 = pneg %p178
        $region66: #{tpu_custom_call.1} parent=63 // pred_check_branch
          %526 = sbr.rel (%p524) target = $region68
        $region67: #{tpu_custom_call.1} parent=63 // pred_region
          %s527 = sand.u32 %s163, 1
          %s528 = scalar_lea.sflag [#allocation4], %s527
          %s529 = sand.u32 %s163, 1
          %s530 = smul.addr %s529, 32
          %s531 = scalar_lea.vmem [#allocation10], %s530
          %532 = dma.done %s528, 512
        $region68: #{tpu_custom_call.1} parent=63 // pred_fallthru
          _
        // Predicated region
        $region69: #{tpu_custom_call.1} parent=63 // pred_check
          %p533 = pneg %p206
        $region70: #{tpu_custom_call.1} parent=63 // pred_check_branch
          %535 = sbr.rel (%p533) target = $region72
        $region71: #{tpu_custom_call.1} parent=63 // pred_region
          %s536 = sand.u32 %s191, 1
          %s537 = scalar_lea.sflag [#allocation12], %s536
          %s538 = sand.u32 %s191, 1
          %s539 = smul.addr %s538, 32
          %s540 = scalar_lea.vmem [#allocation11], %s539
          %541 = dma.done %s537, 512
        $region72: #{tpu_custom_call.1} parent=63 // pred_fallthru
          _
      $region64: #{tpu_custom_call.1} parent=5 // pred_fallthru
        _
    $region6: #{tpu_custom_call.1} parent=1 // loop_footer
      %s31 = sadd.s32 1, %s27
    $region7: #{tpu_custom_call.1} parent=1 // loop_footer_branch
      %26 = sbr.rel target = $region3
    $region8: #{tpu_custom_call.1} parent=1 // loop_exit
      _
    %542 = vsyncpa [#allocation3], 1
    %s543 = scalar_lea.sflag [#allocation3], 1
    %544 = vsyncpa %s543, 1
    %545 = vsyncpa [#allocation6], 1
    %s546 = scalar_lea.sflag [#allocation6], 1
    %547 = vsyncpa %s546, 1
    %548 = vsyncpa [#allocation9], 1
    %s549 = scalar_lea.sflag [#allocation9], 1
    %550 = vsyncpa %s549, 1
    %551 = vsyncpa [#allocation4], 1
    %s552 = scalar_lea.sflag [#allocation4], 1
    %553 = vsyncpa %s552, 1
    %554 = vsyncpa [#allocation12], 1
    %s555 = scalar_lea.sflag [#allocation12], 1
    %556 = vsyncpa %s555, 1

</llo_original>
